<compile_context>
chip_gen: v7x
topology: tpu7x:2x2x1
jax: 0.10.0
libtpu: 0.0.40
codegen_flags: <defaults>
</compile_context>

<pallas_src>
import numpy as np
import jax
import jax.numpy as jnp
from jax.experimental import pallas as pl
from jax.experimental.pallas import tpu as pltpu


def _round_up(x: int, m: int) -> int:
    return ((x + m - 1) // m) * m


def _choose_grid(batch: int, tile_b: int):
    """Split the batch over grid steps with lane-aligned tiles and minimal padding."""
    n = max(1, -(-batch // max(int(tile_b), 128)))   # number of grid steps
    if n > 1 and n % 2 == 1:
        n += 1                                       # even steps -> both v7x TCs busy
    tb = _round_up(-(-batch // n), 128)              # ~even split, lane-aligned
    return n, tb, n * tb


def _orthogonal_torch(key, shape, gain):
    """Matches torch.nn.init.orthogonal_ for a 2-D weight of `shape`=(rows, cols)."""
    rows, cols = shape
    a_shape = (rows, cols) if rows >= cols else (cols, rows)
    a = jax.random.normal(key, a_shape, dtype=jnp.float32)
    q, r = jnp.linalg.qr(a)
    q = q * jnp.sign(jnp.diagonal(r))[None, :]       # torch's sign correction
    if rows < cols:
        q = q.T
    return (gain * q).astype(jnp.float32)


def critic_kernel(xT_ref, w1_ref, b1_ref, w2_ref, b2_ref, w3_ref, b3_ref, o_ref):
    # layer 1: (hidden, S) @ (S, tb) -> (hidden, tb)      [MXU, bf16 in / f32 acc]
    h1 = jnp.dot(w1_ref[...], xT_ref[...], preferred_element_type=jnp.float32)
    h1 = jnp.maximum(h1 + b1_ref[...], 0.0)               # f32 VPU (lane-dense)
    # layer 2: (hidden, hidden) @ (hidden, tb) -> (hidden, tb)
    h2 = jnp.dot(w2_ref[...], h1.astype(w2_ref.dtype),
                 preferred_element_type=jnp.float32)
    h2 = jnp.maximum(h2 + b2_ref[...], 0.0)
    # head (hidden -> 1) in f32: broadcast-mul with the (hidden, 1) weight column
    # and sublane-reduce; output is a lane-dense (1, tb) slab.
    v = jnp.sum(h2 * w3_ref[...], axis=0, keepdims=True)
    o_ref[...] = v + b3_ref[...]


def critic_forward(state, params, tile_b=4096):
    """state: (B, state_dim) f32 -> (B, 1) f32."""
    w1, b1, w2, b2, w3, b3 = params
    B, state_dim = state.shape
    hidden = w1.shape[0]

    n, tb, Bp = _choose_grid(B, tile_b)

    # Stream the state with batch on the lane axis; bf16 halves HBM traffic
    # for the only O(B) operand (one cheap wrapper-side transpose+cast).
    xT = state.T.astype(jnp.bfloat16)                      # (state_dim, B)
    if Bp != B:
        xT = jnp.pad(xT, ((0, 0), (0, Bp - B)))

    # Torch-native (out, in) weights: bf16 for the MXU dots, f32 elsewhere.
    w1b = w1.astype(jnp.bfloat16)
    w2b = w2.astype(jnp.bfloat16)
    b1c = b1.reshape(hidden, 1)
    b2c = b2.reshape(hidden, 1)
    w3c = w3.reshape(hidden, 1)          # head weight as a column (lane broadcast)
    b3c = b3.reshape(1, 1)

    resident = lambda a: pl.BlockSpec(a.shape, lambda i: (0, 0))

    flops = 2 * Bp * (state_dim * hidden + hidden * hidden + hidden)
    bytes_accessed = (xT.size * 2 + w1b.size * 2 + w2b.size * 2
                      + (b1c.size + b2c.size + w3c.size + b3c.size) * 4
                      + Bp * 4)

    out = pl.pallas_call(
        critic_kernel,
        out_shape=jax.ShapeDtypeStruct((1, Bp), jnp.float32),
        grid=(n,),
        in_specs=[
            # streamed (state_dim, tb) batch tiles
            pl.BlockSpec((state_dim, tb), lambda i: (0, i)),
            # weights/biases: constant block index -> VMEM-resident across steps
            resident(w1b), resident(b1c),
            resident(w2b), resident(b2c),
            resident(w3c), resident(b3c),
        ],
        # lane-dense (1, tb) output slabs
        out_specs=pl.BlockSpec((1, tb), lambda i: (0, i)),
        compiler_params=pltpu.CompilerParams(
            dimension_semantics=("parallel",),   # shard batch tiles across TCs (v7x)
        ),
        cost_estimate=pl.CostEstimate(flops=flops, transcendentals=0,
                                      bytes_accessed=bytes_accessed),
    )(xT, w1b, b1c, w2b, b2c, w3c, b3c)

    return out.reshape(-1)[:B].reshape(B, 1)


def make_params(key, state_dim, hidden_dim):
    """Torch-native layouts: W (out, in), b (out,). Biases zero per init_layer."""
    k1, k2, k3 = jax.random.split(key, 3)
    std = float(np.sqrt(2.0))
    w1 = _orthogonal_torch(k1, (hidden_dim, state_dim), std)
    b1 = jnp.zeros((hidden_dim,), jnp.float32)
    w2 = _orthogonal_torch(k2, (hidden_dim, hidden_dim), std)
    b2 = jnp.zeros((hidden_dim,), jnp.float32)
    w3 = _orthogonal_torch(k3, (1, hidden_dim), 1.0)
    b3 = jnp.zeros((1,), jnp.float32)
    return w1, b1, w2, b2, w3, b3


def critic_ref(state, params, mixed=False):
    """Pure-JAX reference. mixed=True mirrors the kernel's bf16-dot / f32-acc path."""
    w1, b1, w2, b2, w3, b3 = params
    dt = jnp.bfloat16 if mixed else jnp.float32
    x = state.astype(dt)
    h1 = jnp.dot(x, w1.astype(dt).T, preferred_element_type=jnp.float32) + b1[None, :]
    h1 = jnp.maximum(h1, 0.0)
    h2 = jnp.dot(h1.astype(dt), w2.astype(dt).T,
                 preferred_element_type=jnp.float32) + b2[None, :]
    h2 = jnp.maximum(h2, 0.0)
    return jnp.sum(h2 * w3, axis=-1, keepdims=True) + b3[None, :]


if __name__ == "__main__":
    key = jax.random.PRNGKey(0)
    k_param, k_state, k_state2 = jax.random.split(key, 3)

    batch, state_dim, hidden_dim = 8, 16, 32
    params = make_params(k_param, state_dim, hidden_dim)
    state = jax.random.normal(k_state, (batch, state_dim), dtype=jnp.float32)

    out = jax.block_until_ready(critic_forward(state, params))
    assert out.shape == (batch, 1)

    # Tight check against a reference that mirrors the kernel's precision path.
    np.testing.assert_allclose(np.asarray(out),
                               np.asarray(critic_ref(state, params, mixed=True)),
                               rtol=1e-3, atol=1e-3)
    # Module-level check against the full-f32 torch-semantics reference
    # (tolerance loosened for the bf16 MXU dots).
    np.testing.assert_allclose(np.asarray(out),
                               np.asarray(critic_ref(state, params, mixed=False)),
                               rtol=5e-2, atol=5e-2)

    # Multi-step grid + non-aligned batch (exercises tiling / remainder path).
    state2 = jax.random.normal(k_state2, (300, state_dim), dtype=jnp.float32)
    out2 = jax.block_until_ready(critic_forward(state2, params, tile_b=128))
    assert out2.shape == (300, 1)
    np.testing.assert_allclose(np.asarray(out2),
                               np.asarray(critic_ref(state2, params, mixed=True)),
                               rtol=1e-3, atol=1e-3)

    print("KERNEL_OK")
</pallas_src>

<mosaic_0001>
module attributes {stable_mosaic.version = 11 : i64} {
  func.func @critic_kernel(%arg0: i32, %arg1: memref<16x128xbf16, #tpu.memory_space<vmem>>, %arg2: memref<32x16xbf16, #tpu.memory_space<vmem>>, %arg3: memref<32x1xf32, #tpu.memory_space<vmem>>, %arg4: memref<32x32xbf16, #tpu.memory_space<vmem>>, %arg5: memref<32x1xf32, #tpu.memory_space<vmem>>, %arg6: memref<32x1xf32, #tpu.memory_space<vmem>>, %arg7: memref<1x1xf32, #tpu.memory_space<vmem>>, %arg8: memref<1x128xf32, #tpu.memory_space<vmem>>) attributes {dimension_semantics = [#tpu.dimension_semantics<parallel>], iteration_bounds = array<i64: 1>, scalar_prefetch = 0 : i64, scratch_operands = 0 : i64, tpu.core_type = #tpu.core_type<tc>, window_params = [{transform_indices = @transform_0, window_bounds = array<i64: 16, 128>}, {pipeline_mode = #tpu.pipeline_mode<synchronous>, transform_indices = @transform_1, window_bounds = array<i64: 32, 16>}, {pipeline_mode = #tpu.pipeline_mode<synchronous>, transform_indices = @transform_2, window_bounds = array<i64: 32, 1>}, {pipeline_mode = #tpu.pipeline_mode<synchronous>, transform_indices = @transform_3, window_bounds = array<i64: 32, 32>}, {pipeline_mode = #tpu.pipeline_mode<synchronous>, transform_indices = @transform_4, window_bounds = array<i64: 32, 1>}, {pipeline_mode = #tpu.pipeline_mode<synchronous>, transform_indices = @transform_5, window_bounds = array<i64: 32, 1>}, {pipeline_mode = #tpu.pipeline_mode<synchronous>, transform_indices = @transform_6, window_bounds = array<i64: 1, 1>}, {transform_indices = @transform_7, window_bounds = array<i64: 1, 128>}]} {
    %c0 = arith.constant 0 : index
    %c0_0 = arith.constant 0 : index
    %0 = vector.load %arg2[%c0, %c0_0] : memref<32x16xbf16, #tpu.memory_space<vmem>>, vector<32x16xbf16>
    %c0_1 = arith.constant 0 : index
    %c0_2 = arith.constant 0 : index
    %1 = vector.load %arg1[%c0_1, %c0_2] : memref<16x128xbf16, #tpu.memory_space<vmem>>, vector<16x128xbf16>
    %cst = arith.constant dense<0.000000e+00> : vector<32x128xf32>
    %2 = tpu.matmul %0, %1, %cst {dimension_numbers = #tpu.dot_dimension_numbers<[1], [0], [0], [1], [0, 0, 1, 1], [], []>} : vector<32x16xbf16>, vector<16x128xbf16>, vector<32x128xf32> -> vector<32x128xf32>
    %c0_3 = arith.constant 0 : index
    %c0_4 = arith.constant 0 : index
    %3 = vector.load %arg3[%c0_3, %c0_4] : memref<32x1xf32, #tpu.memory_space<vmem>>, vector<32x1xf32>
    %4 = vector.broadcast %3 : vector<32x1xf32> to vector<32x128xf32>
    %5 = arith.addf %2, %4 : vector<32x128xf32>
    %cst_5 = arith.constant 0.000000e+00 : f32
    %6 = vector.broadcast %cst_5 : f32 to vector<32x128xf32>
    %7 = arith.maximumf %5, %6 : vector<32x128xf32>
    %c0_6 = arith.constant 0 : index
    %c0_7 = arith.constant 0 : index
    %8 = vector.load %arg4[%c0_6, %c0_7] : memref<32x32xbf16, #tpu.memory_space<vmem>>, vector<32x32xbf16>
    %9 = arith.truncf %7 : vector<32x128xf32> to vector<32x128xbf16>
    %cst_8 = arith.constant dense<0.000000e+00> : vector<32x128xf32>
    %10 = tpu.matmul %8, %9, %cst_8 {dimension_numbers = #tpu.dot_dimension_numbers<[1], [0], [0], [1], [0, 0, 1, 1], [], []>} : vector<32x32xbf16>, vector<32x128xbf16>, vector<32x128xf32> -> vector<32x128xf32>
    %c0_9 = arith.constant 0 : index
    %c0_10 = arith.constant 0 : index
    %11 = vector.load %arg5[%c0_9, %c0_10] : memref<32x1xf32, #tpu.memory_space<vmem>>, vector<32x1xf32>
    %12 = vector.broadcast %11 : vector<32x1xf32> to vector<32x128xf32>
    %13 = arith.addf %10, %12 : vector<32x128xf32>
    %cst_11 = arith.constant 0.000000e+00 : f32
    %14 = vector.broadcast %cst_11 : f32 to vector<32x128xf32>
    %15 = arith.maximumf %13, %14 : vector<32x128xf32>
    %c0_12 = arith.constant 0 : index
    %c0_13 = arith.constant 0 : index
    %16 = vector.load %arg6[%c0_12, %c0_13] : memref<32x1xf32, #tpu.memory_space<vmem>>, vector<32x1xf32>
    %17 = vector.broadcast %16 : vector<32x1xf32> to vector<32x128xf32>
    %18 = arith.mulf %15, %17 : vector<32x128xf32>
    %cst_14 = arith.constant dense<0.000000e+00> : vector<128xf32>
    %19 = vector.multi_reduction <add>, %18, %cst_14 [0] : vector<32x128xf32> to vector<128xf32>
    %20 = vector.shape_cast %19 : vector<128xf32> to vector<1x128xf32>
    %c0_15 = arith.constant 0 : index
    %c0_16 = arith.constant 0 : index
    %21 = vector.load %arg7[%c0_15, %c0_16] : memref<1x1xf32, #tpu.memory_space<vmem>>, vector<1x1xf32>
    %22 = vector.broadcast %21 : vector<1x1xf32> to vector<1x128xf32>
    %23 = arith.addf %20, %22 : vector<1x128xf32>
    %c0_17 = arith.constant 0 : index
    %c0_18 = arith.constant 0 : index
    %24 = vector.load %arg8[%c0_17, %c0_18] : memref<1x128xf32, #tpu.memory_space<vmem>>, vector<1x128xf32>
    tpu.vector_store %arg8[%c0_17, %c0_18], %23 {strides = array<i32>} : memref<1x128xf32, #tpu.memory_space<vmem>>, vector<1x128xf32>,
    return
  }
  func.func @transform_0(%arg0: i32) -> (i32, i32) {
    %c0_i32 = arith.constant 0 : i32
    %c0_i32_0 = arith.constant 0 : i32
    return %c0_i32, %arg0 : i32, i32
  }
  func.func @transform_1(%arg0: i32) -> (i32, i32) {
    %c0_i32 = arith.constant 0 : i32
    %c0_i32_0 = arith.constant 0 : i32
    %c0_i32_1 = arith.constant 0 : i32
    return %c0_i32, %c0_i32_0 : i32, i32
  }
  func.func @transform_2(%arg0: i32) -> (i32, i32) {
    %c0_i32 = arith.constant 0 : i32
    %c0_i32_0 = arith.constant 0 : i32
    %c0_i32_1 = arith.constant 0 : i32
    return %c0_i32, %c0_i32_0 : i32, i32
  }
  func.func @transform_3(%arg0: i32) -> (i32, i32) {
    %c0_i32 = arith.constant 0 : i32
    %c0_i32_0 = arith.constant 0 : i32
    %c0_i32_1 = arith.constant 0 : i32
    return %c0_i32, %c0_i32_0 : i32, i32
  }
  func.func @transform_4(%arg0: i32) -> (i32, i32) {
    %c0_i32 = arith.constant 0 : i32
    %c0_i32_0 = arith.constant 0 : i32
    %c0_i32_1 = arith.constant 0 : i32
    return %c0_i32, %c0_i32_0 : i32, i32
  }
  func.func @transform_5(%arg0: i32) -> (i32, i32) {
    %c0_i32 = arith.constant 0 : i32
    %c0_i32_0 = arith.constant 0 : i32
    %c0_i32_1 = arith.constant 0 : i32
    return %c0_i32, %c0_i32_0 : i32, i32
  }
  func.func @transform_6(%arg0: i32) -> (i32, i32) {
    %c0_i32 = arith.constant 0 : i32
    %c0_i32_0 = arith.constant 0 : i32
    %c0_i32_1 = arith.constant 0 : i32
    return %c0_i32, %c0_i32_0 : i32, i32
  }
  func.func @transform_7(%arg0: i32) -> (i32, i32) {
    %c0_i32 = arith.constant 0 : i32
    %c0_i32_0 = arith.constant 0 : i32
    return %c0_i32, %arg0 : i32, i32
  }
}

</mosaic_0001>

<llo_original>
// kernel: tpu_custom_call.1
$region0: #{tpu_custom_call.1}
  #allocation0 [shape = 'u32[]', space=smem, size = 0x4, offset = 0x4, fixed_abs, tag = 'smem constant byte address 0x4 - core index']
  #allocation1 [shape = 'u32[144,128]{1,0:T(1,128)}', space=vmem, size = 0x12000, scoped, tag = 'internal scratch']
  #allocation2 [shape = 'f32[1,1]{1,0:T(1,128)S(1)}', space=vmem, size = 0x200, scoped, tag = 'scoped memory for tpu_custom_call.1']
  %s0 = inlined_call_operand.vmem [shape: bf16[16,128], index: 0, kind: input, shape index: {}]
  %s1 = inlined_call_operand.vmem [shape: bf16[32,16], index: 1, kind: input, shape index: {}]
  %s2 = inlined_call_operand.vmem [shape: f32[32,1], index: 2, kind: input, shape index: {}]
  %s3 = inlined_call_operand.vmem [shape: bf16[32,32], index: 3, kind: input, shape index: {}]
  %s4 = inlined_call_operand.vmem [shape: f32[32,1], index: 4, kind: input, shape index: {}]
  %s5 = inlined_call_operand.vmem [shape: f32[32,1], index: 5, kind: input, shape index: {}]
  %s6 = inlined_call_operand.<no memory space> [shape: f32[1,1], index: 6, kind: input, shape index: {}]
  %s7 = inlined_call_operand.hbm [shape: f32[1,128], index: 7, kind: output, shape index: {}]
  %s8 = sld [smem:[#allocation0]]
  $region38: #{tpu_custom_call.1} parent=0
    _
  %s10 = ssub.s32 1, %s8
  %s11 = scalar_select 0, %s10, %s8
  %v12 = vstv %s6
  %13 = vst [vmem:[#allocation2] sm:$0x1] %v12
  $region1: #{tpu_custom_call.1} parent=0
    #allocation3 [shape = 'u8[512]{0}', space=vmem, size = 0x400, scoped, tag = 'output window, operand 0, single buffered']
    #allocation4 [shape = 's32[1]{0}', space=sflag, size = 0x4, scoped, tag = 'scoped memory for tpu_custom_call.1']
    %14 = vsyncpa [#allocation4], 0
    // Predicated region
    $region2: #{tpu_custom_call.1} parent=1 // pred_check
      _
    $region3: #{tpu_custom_call.1} parent=1 // pred_check_branch
      %16 = sbr.rel (0) target = $region5
    $region4: #{tpu_custom_call.1} parent=1 // pred_region
      _
    $region5: #{tpu_custom_call.1} parent=1 // pred_fallthru
      _
    // Predicated region
    $region6: #{tpu_custom_call.1} parent=1 // pred_check
      _
    $region7: #{tpu_custom_call.1} parent=1 // pred_check_branch
      %18 = sbr.rel (0) target = $region9
    $region8: #{tpu_custom_call.1} parent=1 // pred_region
      _
    $region9: #{tpu_custom_call.1} parent=1 // pred_fallthru
      _
    // Predicated region
    $region10: #{tpu_custom_call.1} parent=1 // pred_check
      _
    $region11: #{tpu_custom_call.1} parent=1 // pred_check_branch
      %20 = sbr.rel (0) target = $region13
    $region12: #{tpu_custom_call.1} parent=1 // pred_region
      _
    $region13: #{tpu_custom_call.1} parent=1 // pred_fallthru
      _
    // Predicated region
    $region14: #{tpu_custom_call.1} parent=1 // pred_check
      _
    $region15: #{tpu_custom_call.1} parent=1 // pred_check_branch
      %22 = sbr.rel (0) target = $region17
    $region16: #{tpu_custom_call.1} parent=1 // pred_region
      _
    $region17: #{tpu_custom_call.1} parent=1 // pred_fallthru
      _
    // Predicated region
    $region18: #{tpu_custom_call.1} parent=1 // pred_check
      _
    $region19: #{tpu_custom_call.1} parent=1 // pred_check_branch
      %24 = sbr.rel (0) target = $region21
    $region20: #{tpu_custom_call.1} parent=1 // pred_region
      _
    $region21: #{tpu_custom_call.1} parent=1 // pred_fallthru
      _
    // Predicated region
    $region22: #{tpu_custom_call.1} parent=1 // pred_check
      _
    $region23: #{tpu_custom_call.1} parent=1 // pred_check_branch
      %26 = sbr.rel (0) target = $region25
    $region24: #{tpu_custom_call.1} parent=1 // pred_region
      _
    $region25: #{tpu_custom_call.1} parent=1 // pred_fallthru
      _
    // Predicated region
    $region26: #{tpu_custom_call.1} parent=1 // pred_check
      _
    $region27: #{tpu_custom_call.1} parent=1 // pred_check_branch
      %28 = sbr.rel (0) target = $region29
    $region28: #{tpu_custom_call.1} parent=1 // pred_region
      _
    $region29: #{tpu_custom_call.1} parent=1 // pred_fallthru
      _
    %v30 = vld [vmem:[%s1] sm:$0xf]
    %v31 = vld [vmem:[%s1 + $0x4] sm:$0xf]
    %v32 = vld [vmem:[%s1 + $0x8] sm:$0xf]
    %v33 = vld [vmem:[%s1 + $0xc] sm:$0xf]
    %v34 = vld [vmem:[%s0] sm:$0xf]
    %v35 = vld [vmem:[%s0 + $0x4] sm:$0xf]
    %v36 = vld [vmem:[%s2] sm:$0xff]
    %v37 = vld [vmem:[%s2 + $0x8] sm:$0xff]
    %v38 = vld [vmem:[%s2 + $0x10] sm:$0xff]
    %v39 = vld [vmem:[%s2 + $0x18] sm:$0xff]
    %41 = vset.pattern.permute.xlu0 0
    %42 = vperm.xlu0 %41, %v36
    %v43 = vpop.permute.xlu0 %42
    %46 = vset.pattern.permute.xlu0 0
    %47 = vperm.xlu0 %46, %v37
    %v48 = vpop.permute.xlu0 %47
    %51 = vset.pattern.permute.xlu0 0
    %52 = vperm.xlu0 %51, %v38
    %v53 = vpop.permute.xlu0 %52
    %56 = vset.pattern.permute.xlu0 0
    %57 = vperm.xlu0 %56, %v39
    %v58 = vpop.permute.xlu0 %57
    %v64 = vunpack.c.l.b16 %v30
    %v65 = vunpack.c.l.b16 %v31
    %v66 = vunpack.c.l.b16 %v32
    %v67 = vunpack.c.l.b16 %v33
    %v68 = vpack.c.b16 %v65, %v64
    %v69 = vpack.c.b16 %v67, %v66
    %v72 = vunpack.c.l.b16 %v34
    %v73 = vunpack.c.l.b16 %v35
    %v74 = vpack.c.b16 %v73, %v72
    %vm76 = vcmask 130048
    %v78 = vsel %vm76, %v68, 0
    %v81 = vsel %vm76, %v69, 0
    %83 = vmatprep.subr.bf16.mxu0 0
    %84 = vmatpush1.bf16.msra.mxu0 %v74
    %85 = vmatprep.subr.bf16.mxu0 0
    %86 = vmatpush1.bf16.msra.mxu0 0
    %87 = vmatprep.subr.bf16.mxu0 0
    %88 = vmatpush1.bf16.msra.mxu0 0
    %89 = vmatprep.subr.bf16.mxu0 0
    %90 = vmatpush1.bf16.msra.mxu0 0
    %91 = vmatprep.subr.bf16.mxu0 0
    %92 = vmatpush1.bf16.msra.mxu0 0
    %93 = vmatprep.subr.bf16.mxu0 0
    %94 = vmatpush1.bf16.msra.mxu0 0
    %95 = vmatprep.subr.bf16.mxu0 0
    %96 = vmatpush1.bf16.msra.mxu0 0
    %97 = vmatprep.subr.bf16.mxu0 0
    %98 = vmatpush1.bf16.msra.mxu0 0
    %99 = vmatprep.subr.bf16.mxu0 0
    %100 = vmatpush1.bf16.msra.mxu0 0
    %101 = vmatprep.subr.bf16.mxu0 0
    %102 = vmatpush1.bf16.msra.mxu0 0
    %103 = vmatprep.subr.bf16.mxu0 0
    %104 = vmatpush1.bf16.msra.mxu0 0
    %105 = vmatprep.subr.bf16.mxu0 0
    %106 = vmatpush1.bf16.msra.mxu0 0
    %107 = vmatprep.subr.bf16.mxu0 0
    %108 = vmatpush1.bf16.msra.mxu0 0
    %109 = vmatprep.subr.bf16.mxu0 0
    %110 = vmatpush1.bf16.msra.mxu0 0
    %111 = vmatprep.subr.bf16.mxu0 0
    %112 = vmatpush1.bf16.msra.mxu0 0
    %113 = vmatprep.subr.bf16.mxu0 0
    %114 = vmatpush1.bf16.msra.mxu0 0
    %115 = vmatprep.mubr.bf16.mxu0 0
    %116 = vmatmul.mubr.bf16.gmra.mrb[0].mxu0 %v78
    %v117 = vpop.f32.mrb[0].mxu0
    %v118 = vadd.f32 %v43, %v117
    %v119 = vpop.f32.mrb[0].mxu0
    %v120 = vpop.f32.mrb[0].mxu0
    %v121 = vadd.f32 %v48, %v120
    %v122 = vpop.f32.mrb[0].mxu0
    %123 = vmatprep.mubr.bf16.mxu0 0
    %124 = vmatmul.mubr.bf16.gmra.mrb[0].mxu0 %v81
    %v125 = vpop.f32.mrb[0].mxu0
    %v126 = vadd.f32 %v53, %v125
    %v127 = vpop.f32.mrb[0].mxu0
    %v128 = vpop.f32.mrb[0].mxu0
    %v129 = vadd.f32 %v58, %v128
    %v130 = vpop.f32.mrb[0].mxu0
    %131 = vdwg.mxu0
    %v132 = vmax.f32 %v118, 0.0
    %v133 = vmax.f32 %v121, 0.0
    %v134 = vmax.f32 %v126, 0.0
    %v135 = vmax.f32 %v129, 0.0
    %v136 = vld [vmem:[%s3] sm:$0xf]
    %v137 = vld [vmem:[%s3 + $0x4] sm:$0xf]
    %v138 = vld [vmem:[%s3 + $0x8] sm:$0xf]
    %v139 = vld [vmem:[%s3 + $0xc] sm:$0xf]
    %v140 = vpack.c.bf16 %v133, %v132
    %v141 = vpack.c.bf16 %v135, %v134
    %v142 = vld [vmem:[%s4] sm:$0xff]
    %v143 = vld [vmem:[%s4 + $0x8] sm:$0xff]
    %v144 = vld [vmem:[%s4 + $0x10] sm:$0xff]
    %v145 = vld [vmem:[%s4 + $0x18] sm:$0xff]
    %147 = vset.pattern.permute.xlu0 0
    %148 = vperm.xlu0 %147, %v142
    %v149 = vpop.permute.xlu0 %148
    %152 = vset.pattern.permute.xlu0 0
    %153 = vperm.xlu0 %152, %v143
    %v154 = vpop.permute.xlu0 %153
    %157 = vset.pattern.permute.xlu0 0
    %158 = vperm.xlu0 %157, %v144
    %v159 = vpop.permute.xlu0 %158
    %162 = vset.pattern.permute.xlu0 0
    %163 = vperm.xlu0 %162, %v145
    %v164 = vpop.permute.xlu0 %163
    %v170 = vunpack.c.l.b16 %v136
    %v171 = vunpack.c.l.b16 %v137
    %v172 = vunpack.c.l.b16 %v138
    %v173 = vunpack.c.l.b16 %v139
    %v174 = vpack.c.b16 %v171, %v170
    %v175 = vpack.c.b16 %v173, %v172
    %vm176 = vcmask 261120
    %v178 = vsel %vm176, %v174, 0
    %v181 = vsel %vm176, %v175, 0
    %183 = vmatprep.subr.bf16.mxu0 0
    %184 = vmatpush1.bf16.msra.mxu0 %v140
    %185 = vmatprep.subr.bf16.mxu0 0
    %186 = vmatpush1.bf16.msra.mxu0 %v141
    %187 = vmatprep.subr.bf16.mxu0 0
    %188 = vmatpush1.bf16.msra.mxu0 0
    %189 = vmatprep.subr.bf16.mxu0 0
    %190 = vmatpush1.bf16.msra.mxu0 0
    %191 = vmatprep.subr.bf16.mxu0 0
    %192 = vmatpush1.bf16.msra.mxu0 0
    %193 = vmatprep.subr.bf16.mxu0 0
    %194 = vmatpush1.bf16.msra.mxu0 0
    %195 = vmatprep.subr.bf16.mxu0 0
    %196 = vmatpush1.bf16.msra.mxu0 0
    %197 = vmatprep.subr.bf16.mxu0 0
    %198 = vmatpush1.bf16.msra.mxu0 0
    %199 = vmatprep.subr.bf16.mxu0 0
    %200 = vmatpush1.bf16.msra.mxu0 0
    %201 = vmatprep.subr.bf16.mxu0 0
    %202 = vmatpush1.bf16.msra.mxu0 0
    %203 = vmatprep.subr.bf16.mxu0 0
    %204 = vmatpush1.bf16.msra.mxu0 0
    %205 = vmatprep.subr.bf16.mxu0 0
    %206 = vmatpush1.bf16.msra.mxu0 0
    %207 = vmatprep.subr.bf16.mxu0 0
    %208 = vmatpush1.bf16.msra.mxu0 0
    %209 = vmatprep.subr.bf16.mxu0 0
    %210 = vmatpush1.bf16.msra.mxu0 0
    %211 = vmatprep.subr.bf16.mxu0 0
    %212 = vmatpush1.bf16.msra.mxu0 0
    %213 = vmatprep.subr.bf16.mxu0 0
    %214 = vmatpush1.bf16.msra.mxu0 0
    %215 = vmatprep.mubr.bf16.mxu0 0
    %216 = vmatmul.mubr.bf16.gmra.mrb[0].mxu0 %v178
    %v217 = vpop.f32.mrb[0].mxu0
    %v218 = vadd.f32 %v149, %v217
    %v219 = vpop.f32.mrb[0].mxu0
    %v220 = vpop.f32.mrb[0].mxu0
    %v221 = vadd.f32 %v154, %v220
    %v222 = vpop.f32.mrb[0].mxu0
    %223 = vmatprep.mubr.bf16.mxu0 0
    %224 = vmatmul.mubr.bf16.gmra.mrb[0].mxu0 %v181
    %v225 = vpop.f32.mrb[0].mxu0
    %v226 = vadd.f32 %v159, %v225
    %v227 = vpop.f32.mrb[0].mxu0
    %v228 = vpop.f32.mrb[0].mxu0
    %v229 = vadd.f32 %v164, %v228
    %v230 = vpop.f32.mrb[0].mxu0
    %231 = vdwg.mxu0
    %v232 = vmax.f32 %v218, 0.0
    %v233 = vmax.f32 %v221, 0.0
    %v234 = vmax.f32 %v226, 0.0
    %v235 = vmax.f32 %v229, 0.0
    %v236 = vld [vmem:[%s5] sm:$0xff]
    %v237 = vld [vmem:[%s5 + $0x8] sm:$0xff]
    %v238 = vld [vmem:[%s5 + $0x10] sm:$0xff]
    %v239 = vld [vmem:[%s5 + $0x18] sm:$0xff]
    %241 = vset.pattern.permute.xlu0 0
    %242 = vperm.xlu0 %241, %v236
    %v243 = vpop.permute.xlu0 %242
    %246 = vset.pattern.permute.xlu0 0
    %247 = vperm.xlu0 %246, %v237
    %v248 = vpop.permute.xlu0 %247
    %251 = vset.pattern.permute.xlu0 0
    %252 = vperm.xlu0 %251, %v238
    %v253 = vpop.permute.xlu0 %252
    %256 = vset.pattern.permute.xlu0 0
    %257 = vperm.xlu0 %256, %v239
    %v258 = vpop.permute.xlu0 %257
    %v260 = vmul.f32 %v232, %v243
    %v261 = vmul.f32 %v233, %v248
    %v262 = vmul.f32 %v234, %v253
    %v263 = vmul.f32 %v235, %v258
    %v264 = vadd.f32 %v260, %v261
    %v265 = vadd.f32 %v264, %v262
    %v266 = vadd.f32 %v265, %v263
    %v267 = vrot.slane %v266, 4
    %v268 = vadd.f32 %v266, %v267
    %v269 = vrot.slane %v268, 2
    %v270 = vadd.f32 %v268, %v269
    %v271 = vrot.slane %v270, 1
    %v272 = vadd.f32 %v270, %v271
    %v273 = vld [vmem:[#allocation2] sm:$0x1]
    %275 = vset.pattern.permute.xlu0 0
    %276 = vperm.xlu0 %275, %v273
    %v277 = vpop.permute.xlu0 %276
    %v279 = vlaneseq
    %v280 = vshrl.u32 %v279, 7
    %v281 = vsub.s32 0, %v280
    %v282 = vrot.slane %v277, %v281
    %v283 = vadd.f32 %v272, %v282
    %284 = vst [vmem:[#allocation3] sm:$0x1] %v283
    // Predicated region
    $region30: #{tpu_custom_call.1} parent=1 // pred_check
      _
    $region31: #{tpu_custom_call.1} parent=1 // pred_check_branch
      %286 = sbr.rel (0) target = $region33
    $region32: #{tpu_custom_call.1} parent=1 // pred_region
      %s288 = ssub.s32 16, 16
      %289 = vsyncadd [#allocation4], %s288
      %s291 = sshll.u32 [#allocation3], 4
      %s292 = int_to_ptr.vmem [resolvable:$true] %s291
      %294 = dma.vmem_to_hbm [thread:$0]  %s292, 16, %s7, [#allocation4]
    $region33: #{tpu_custom_call.1} parent=1 // pred_fallthru
      _
    // Predicated region
    $region34: #{tpu_custom_call.1} parent=1 // pred_check
      _
    $region35: #{tpu_custom_call.1} parent=1 // pred_check_branch
      %296 = sbr.rel (0) target = $region37
    $region36: #{tpu_custom_call.1} parent=1 // pred_region
      %297 = dma.done [#allocation4], 16
    $region37: #{tpu_custom_call.1} parent=1 // pred_fallthru
      _
    %298 = vsyncpa [#allocation4], 1

</llo_original>
